<compile_context>
chip_gen: v6e
topology: v6e:2x2x1
jax: 0.10.0
libtpu: 0.0.40
codegen_flags: <defaults>
</compile_context>

<pallas_src>
import functools

import jax
import jax.numpy as jnp
from jax.experimental import pallas as pl
from jax.experimental.pallas import tpu as pltpu


def _round_up(x, m):
    return ((x + m - 1) // m) * m


def _choose_block_rows(n):
    # Multiple of 8 (full sublanes); cap at 256 rows per grid step.
    return min(256, _round_up(max(n, 1), 8))


def _vmem_limit_bytes(v, block_rows, dtype_bytes=4):
    table_bytes = v * v * dtype_bytes
    # ~2x double-buffered (R, V) logits out + in-kernel temporaries + headroom.
    io_bytes = 8 * block_rows * v * dtype_bytes
    need = table_bytes + io_bytes + (4 << 20)
    return int(min(max(need, 16 << 20), 60 << 20))


def _bigram_loss_kernel(idx_ref, tgt_ref, table_ref, logits_ref, loss_ref, *,
                        n_valid, block_rows):
    # idx_ref    : (R, 1) int32  VMEM -- token ids for this row block
    # tgt_ref    : (R, 1) int32  VMEM -- targets for this row block
    # table_ref  : (V, V) f32    VMEM -- full embedding table (resident)
    # logits_ref : (R, V) f32    VMEM -- gathered rows (logits) for this block
    # loss_ref   : (R, 1) f32    VMEM -- per-row CE terms (0 for padded rows)
    b = pl.program_id(0)
    table = table_ref[...]
    idx = idx_ref[...]                                        # (R, 1)
    tgt = tgt_ref[...]                                        # (R, 1)

    r, v = logits_ref.shape
    cols = jax.lax.broadcasted_iota(jnp.int32, (r, v), 1)     # hoisted, one per block

    # In-VMEM gather of R rows via one-hot MXU matmul (exact at HIGHEST precision).
    one_hot = (cols == idx).astype(table.dtype)
    logits = jnp.dot(one_hot, table,
                     preferred_element_type=jnp.float32,
                     precision=jax.lax.Precision.HIGHEST)     # (R, V)
    logits_ref[...] = logits.astype(logits_ref.dtype)

    # Numerically stable logsumexp over the vocab (lane) axis, whole block at once.
    m = jnp.max(logits, axis=-1, keepdims=True)                              # (R, 1)
    lse = m + jnp.log(jnp.sum(jnp.exp(logits - m), axis=-1, keepdims=True))  # (R, 1)

    # Correct-class logit: single vectorized where + lane reduction.
    correct = jnp.sum(jnp.where(cols == tgt, logits, 0.0), axis=-1, keepdims=True)

    # Mask padded rows (global row id >= n_valid) so the wrapper sum is exact.
    rows = jax.lax.broadcasted_iota(jnp.int32, (r, 1), 0)
    valid = (b * block_rows + rows) < n_valid
    loss_ref[...] = jnp.where(valid, lse - correct, 0.0)


def _bigram_logits_kernel(idx_ref, table_ref, logits_ref):
    # Inference path: pure gather via one-hot MXU matmul on the resident table.
    table = table_ref[...]
    idx = idx_ref[...]                                        # (R, 1)
    r, v = logits_ref.shape
    cols = jax.lax.broadcasted_iota(jnp.int32, (r, v), 1)
    one_hot = (cols == idx).astype(table.dtype)
    logits_ref[...] = jnp.dot(one_hot, table,
                              preferred_element_type=jnp.float32,
                              precision=jax.lax.Precision.HIGHEST
                              ).astype(logits_ref.dtype)


@functools.partial(jax.jit, static_argnames=("n_valid", "block_rows"))
def _forward_with_loss(idx_pad, tgt_pad, table, *, n_valid, block_rows):
    n_pad = idx_pad.shape[0]
    v = table.shape[-1]
    num_blocks = n_pad // block_rows
    kernel = functools.partial(_bigram_loss_kernel,
                               n_valid=n_valid, block_rows=block_rows)
    logits, per_row = pl.pallas_call(
        kernel,
        grid_spec=pltpu.PrefetchScalarGridSpec(
            num_scalar_prefetch=0,
            grid=(num_blocks,),
            in_specs=[
                pl.BlockSpec((block_rows, 1), lambda b: (b, 0)),   # idx
                pl.BlockSpec((block_rows, 1), lambda b: (b, 0)),   # targets
                pl.BlockSpec((v, v), lambda b: (0, 0)),            # table (resident)
            ],
            out_specs=(
                pl.BlockSpec((block_rows, v), lambda b: (b, 0)),   # logits
                pl.BlockSpec((block_rows, 1), lambda b: (b, 0)),   # per-row loss
            ),
        ),
        out_shape=(
            jax.ShapeDtypeStruct((n_pad, v), jnp.float32),
            jax.ShapeDtypeStruct((n_pad, 1), jnp.float32),
        ),
        compiler_params=pltpu.CompilerParams(
            dimension_semantics=("parallel",),
            vmem_limit_bytes=_vmem_limit_bytes(v, block_rows),
        ),
    )(idx_pad, tgt_pad, table)
    loss = jnp.sum(per_row) / n_valid
    return logits[:n_valid], loss


@functools.partial(jax.jit, static_argnames=("n_valid", "block_rows"))
def _forward_logits_only(idx_pad, table, *, n_valid, block_rows):
    n_pad = idx_pad.shape[0]
    v = table.shape[-1]
    num_blocks = n_pad // block_rows
    logits = pl.pallas_call(
        _bigram_logits_kernel,
        grid_spec=pltpu.PrefetchScalarGridSpec(
            num_scalar_prefetch=0,
            grid=(num_blocks,),
            in_specs=[
                pl.BlockSpec((block_rows, 1), lambda b: (b, 0)),   # idx
                pl.BlockSpec((v, v), lambda b: (0, 0)),            # table (resident)
            ],
            out_specs=pl.BlockSpec((block_rows, v), lambda b: (b, 0)),
        ),
        out_shape=jax.ShapeDtypeStruct((n_pad, v), jnp.float32),
        compiler_params=pltpu.CompilerParams(
            dimension_semantics=("parallel",),
            vmem_limit_bytes=_vmem_limit_bytes(v, block_rows),
        ),
    )(idx_pad, table)
    return logits[:n_valid]


def bigram_forward(idx, table, targets=None):
    """Forward pass of BigramLanguageModel.

    Mirrors the PyTorch module: with targets, logits are returned flattened to
    (B*T, V) and loss is the mean cross entropy; without targets, logits are
    (B, T, V) and loss is None.
    """
    B, T = idx.shape
    V = table.shape[-1]
    N = B * T
    R = _choose_block_rows(N)
    n_pad = _round_up(N, R)
    idx_pad = jnp.pad(idx.reshape(-1).astype(jnp.int32), (0, n_pad - N))
    idx_pad = idx_pad.reshape(n_pad, 1)
    if targets is None:
        logits = _forward_logits_only(idx_pad, table, n_valid=N, block_rows=R)
        return logits.reshape(B, T, V), None
    tgt_pad = jnp.pad(targets.reshape(-1).astype(jnp.int32), (0, n_pad - N))
    tgt_pad = tgt_pad.reshape(n_pad, 1)
    logits, loss = _forward_with_loss(idx_pad, tgt_pad, table,
                                      n_valid=N, block_rows=R)
    return logits, loss


if __name__ == "__main__":
    key = jax.random.PRNGKey(0)
    k_table, k_idx, k_tgt = jax.random.split(key, 3)

    vocab_size = 128   # multiple of 128 keeps (R, V) blocks lane-dense
    B, T = 2, 8        # B*T = 16 rows

    # nn.Embedding default init: N(0, 1)
    table = jax.random.normal(k_table, (vocab_size, vocab_size), dtype=jnp.float32)
    idx = jax.random.randint(k_idx, (B, T), 0, vocab_size, dtype=jnp.int32)
    targets = jax.random.randint(k_tgt, (B, T), 0, vocab_size, dtype=jnp.int32)

    # Training-style call (with targets) and inference-style call (no targets).
    logits, loss = bigram_forward(idx, table, targets)
    logits_inf, loss_none = bigram_forward(idx, table, None)
    jax.block_until_ready((logits, loss, logits_inf))

    # Reference check in plain JAX.
    ref_logits = table[idx]                                   # (B, T, V)
    lf = ref_logits.reshape(B * T, vocab_size)
    tf = targets.reshape(B * T)
    ref_lse = jax.scipy.special.logsumexp(lf, axis=-1)
    ref_loss = jnp.mean(ref_lse - lf[jnp.arange(B * T), tf])

    assert logits.shape == (B * T, vocab_size)
    assert logits_inf.shape == (B, T, vocab_size)
    assert loss_none is None
    assert jnp.allclose(logits, lf, atol=1e-5), "logits (loss path) mismatch"
    assert jnp.allclose(logits_inf, ref_logits, atol=1e-5), "logits (inference) mismatch"
    assert jnp.allclose(loss, ref_loss, atol=1e-5, rtol=1e-5), "loss mismatch"

    print("KERNEL_OK")
</pallas_src>

<mosaic_0001>
module attributes {stable_mosaic.version = 11 : i64} {
  func.func @_bigram_loss_kernel(%arg0: i32, %arg1: memref<16x1xi32, #tpu.memory_space<vmem>>, %arg2: memref<16x1xi32, #tpu.memory_space<vmem>>, %arg3: memref<128x128xf32, #tpu.memory_space<vmem>>, %arg4: memref<16x128xf32, #tpu.memory_space<vmem>>, %arg5: memref<16x1xf32, #tpu.memory_space<vmem>>) attributes {dimension_semantics = [#tpu.dimension_semantics<parallel>], iteration_bounds = array<i64: 1>, scalar_prefetch = 0 : i64, scratch_operands = 0 : i64, tpu.core_type = #tpu.core_type<tc>, window_params = [{transform_indices = @transform_0, window_bounds = array<i64: 16, 1>}, {transform_indices = @transform_1, window_bounds = array<i64: 16, 1>}, {pipeline_mode = #tpu.pipeline_mode<synchronous>, transform_indices = @transform_2, window_bounds = array<i64: 128, 128>}, {transform_indices = @transform_3, window_bounds = array<i64: 16, 128>}, {transform_indices = @transform_4, window_bounds = array<i64: 16, 1>}]} {
    %c0 = arith.constant 0 : index
    %c0_0 = arith.constant 0 : index
    %0 = vector.load %arg3[%c0, %c0_0] : memref<128x128xf32, #tpu.memory_space<vmem>>, vector<128x128xf32>
    %c0_1 = arith.constant 0 : index
    %c0_2 = arith.constant 0 : index
    %1 = vector.load %arg1[%c0_1, %c0_2] : memref<16x1xi32, #tpu.memory_space<vmem>>, vector<16x1xi32>
    %c0_3 = arith.constant 0 : index
    %c0_4 = arith.constant 0 : index
    %2 = vector.load %arg2[%c0_3, %c0_4] : memref<16x1xi32, #tpu.memory_space<vmem>>, vector<16x1xi32>
    %3 = tpu.iota {dimensions = array<i32: 1>} : vector<16x128xi32>
    %4 = vector.broadcast %1 : vector<16x1xi32> to vector<16x128xi32>
    %5 = arith.cmpi eq, %3, %4 : vector<16x128xi32>
    %6 = arith.extui %5 : vector<16x128xi1> to vector<16x128xi32>
    %7 = arith.sitofp %6 : vector<16x128xi32> to vector<16x128xf32>
    %cst = arith.constant dense<0.000000e+00> : vector<16x128xf32>
    %8 = tpu.matmul %7, %0, %cst {dimension_numbers = #tpu.dot_dimension_numbers<[1], [0], [0], [1], [0, 0, 1, 1], [], []>, precision = #tpu.contract_precision<fp32>} : vector<16x128xf32>, vector<128x128xf32>, vector<16x128xf32> -> vector<16x128xf32>
    %c0_5 = arith.constant 0 : index
    %c0_6 = arith.constant 0 : index
    %9 = vector.load %arg4[%c0_5, %c0_6] : memref<16x128xf32, #tpu.memory_space<vmem>>, vector<16x128xf32>
    tpu.vector_store %arg4[%c0_5, %c0_6], %8 {strides = array<i32>} : memref<16x128xf32, #tpu.memory_space<vmem>>, vector<16x128xf32>,
    %cst_7 = arith.constant dense<0xFF800000> : vector<16xf32>
    %10 = vector.multi_reduction <maximumf>, %8, %cst_7 [1] : vector<16x128xf32> to vector<16xf32>
    %11 = vector.shape_cast %10 : vector<16xf32> to vector<16x1xf32>
    %12 = vector.broadcast %11 : vector<16x1xf32> to vector<16x128xf32>
    %13 = arith.subf %8, %12 : vector<16x128xf32>
    %14 = math.exp %13 : vector<16x128xf32>
    %cst_8 = arith.constant dense<0.000000e+00> : vector<16xf32>
    %15 = vector.multi_reduction <add>, %14, %cst_8 [1] : vector<16x128xf32> to vector<16xf32>
    %16 = vector.shape_cast %15 : vector<16xf32> to vector<16x1xf32>
    %17 = math.log %16 : vector<16x1xf32>
    %18 = arith.addf %11, %17 : vector<16x1xf32>
    %19 = vector.broadcast %2 : vector<16x1xi32> to vector<16x128xi32>
    %20 = arith.cmpi eq, %3, %19 : vector<16x128xi32>
    %cst_9 = arith.constant 0.000000e+00 : f32
    %21 = vector.broadcast %cst_9 : f32 to vector<16x128xf32>
    %22 = arith.select %20, %8, %21 : vector<16x128xi1>, vector<16x128xf32>
    %cst_10 = arith.constant dense<0.000000e+00> : vector<16xf32>
    %23 = vector.multi_reduction <add>, %22, %cst_10 [1] : vector<16x128xf32> to vector<16xf32>
    %24 = vector.shape_cast %23 : vector<16xf32> to vector<16x1xf32>
    %25 = tpu.iota {dimensions = array<i32: 0>} : vector<16x1xi32>
    %c16_i32 = arith.constant 16 : i32
    %26 = arith.muli %arg0, %c16_i32 : i32
    %27 = vector.broadcast %26 : i32 to vector<16x1xi32>
    %28 = arith.addi %27, %25 : vector<16x1xi32>
    %c16_i32_11 = arith.constant 16 : i32
    %29 = vector.broadcast %c16_i32_11 : i32 to vector<16x1xi32>
    %30 = arith.cmpi slt, %28, %29 : vector<16x1xi32>
    %31 = arith.subf %18, %24 : vector<16x1xf32>
    %cst_12 = arith.constant 0.000000e+00 : f32
    %32 = vector.broadcast %cst_12 : f32 to vector<16x1xf32>
    %33 = arith.select %30, %31, %32 : vector<16x1xi1>, vector<16x1xf32>
    %c0_13 = arith.constant 0 : index
    %c0_14 = arith.constant 0 : index
    %34 = vector.load %arg5[%c0_13, %c0_14] : memref<16x1xf32, #tpu.memory_space<vmem>>, vector<16x1xf32>
    tpu.vector_store %arg5[%c0_13, %c0_14], %33 {strides = array<i32>} : memref<16x1xf32, #tpu.memory_space<vmem>>, vector<16x1xf32>,
    return
  }
  func.func @transform_0(%arg0: i32) -> (i32, i32) {
    %c0_i32 = arith.constant 0 : i32
    %c0_i32_0 = arith.constant 0 : i32
    return %arg0, %c0_i32 : i32, i32
  }
  func.func @transform_1(%arg0: i32) -> (i32, i32) {
    %c0_i32 = arith.constant 0 : i32
    %c0_i32_0 = arith.constant 0 : i32
    return %arg0, %c0_i32 : i32, i32
  }
  func.func @transform_2(%arg0: i32) -> (i32, i32) {
    %c0_i32 = arith.constant 0 : i32
    %c0_i32_0 = arith.constant 0 : i32
    %c0_i32_1 = arith.constant 0 : i32
    return %c0_i32, %c0_i32_0 : i32, i32
  }
  func.func @transform_3(%arg0: i32) -> (i32, i32) {
    %c0_i32 = arith.constant 0 : i32
    %c0_i32_0 = arith.constant 0 : i32
    return %arg0, %c0_i32 : i32, i32
  }
  func.func @transform_4(%arg0: i32) -> (i32, i32) {
    %c0_i32 = arith.constant 0 : i32
    %c0_i32_0 = arith.constant 0 : i32
    return %arg0, %c0_i32 : i32, i32
  }
}

</mosaic_0001>

<llo_original>
// kernel: _forward_with_loss.1
$region0: #{_forward_with_loss.1}
  #allocation0 [shape = 'u32[]', space=smem, size = 0x4, offset = 0x4, fixed_abs, tag = 'smem constant byte address 0x4 - core index']
  #allocation1 [shape = 'u32[144,128]{1,0:T(1,128)}', space=vmem, size = 0x12000, scoped, tag = 'internal scratch']
  %s0 = inlined_call_operand.vmem [shape: s32[16,1], index: 0, kind: input, shape index: {}]
  %s1 = inlined_call_operand.vmem [shape: s32[16,1], index: 1, kind: input, shape index: {}]
  %s2 = inlined_call_operand.hbm [shape: f32[128,128], index: 2, kind: input, shape index: {}]
  %s3 = inlined_call_operand.hbm [shape: f32[16,128], index: 3, kind: output, shape index: {0}]
  %s4 = inlined_call_operand.vmem [shape: f32[16,1], index: 4, kind: output, shape index: {1}]
  %5 = xla_tuple %s3, %s4
  %s6 = sld [smem:[#allocation0]]
  $region34: #{_forward_with_loss.1} parent=0
    _
  %s8 = ssub.s32 1, %s6
  %s9 = scalar_select 0, %s8, %s6
  $region1: #{_forward_with_loss.1} parent=0
    #allocation2 [shape = 'u8[65536]{0}', space=vmem, size = 0x10000, scoped, tag = 'input window, operand 2, single buffered']
    #allocation3 [shape = 's32[1]{0}', space=sflag, size = 0x4, scoped, tag = 'scoped memory for _forward_with_loss.1']
    #allocation4 [shape = 's32[1]{0}', space=sflag, size = 0x4, scoped, tag = 'scoped memory for _forward_with_loss.1']
    #allocation5 [shape = 'u8[8192]{0}', space=vmem, size = 0x2000, scoped, tag = 'output window, operand 0, single buffered']
    %10 = vsyncpa [#allocation3], 0
    %11 = vsyncpa [#allocation4], 0
    // Predicated region
    $region2: #{_forward_with_loss.1} parent=1 // pred_check
      _
    $region3: #{_forward_with_loss.1} parent=1 // pred_check_branch
      %13 = sbr.rel (0) target = $region5
    $region4: #{_forward_with_loss.1} parent=1 // pred_region
      _
    $region5: #{_forward_with_loss.1} parent=1 // pred_fallthru
      _
    // Predicated region
    $region6: #{_forward_with_loss.1} parent=1 // pred_check
      _
    $region7: #{_forward_with_loss.1} parent=1 // pred_check_branch
      %15 = sbr.rel (0) target = $region9
    $region8: #{_forward_with_loss.1} parent=1 // pred_region
      _
    $region9: #{_forward_with_loss.1} parent=1 // pred_fallthru
      _
    // Predicated region
    $region10: #{_forward_with_loss.1} parent=1 // pred_check
      _
    $region11: #{_forward_with_loss.1} parent=1 // pred_check_branch
      %17 = sbr.rel (0) target = $region13
    $region12: #{_forward_with_loss.1} parent=1 // pred_region
      %s19 = ssub.s32 2048, 2048
      %20 = vsyncadd [#allocation3], %s19
      %s21 = sshll.u32 [#allocation2], 4
      %s22 = int_to_ptr.vmem [resolvable:$true] %s21
      %27 = dma.hbm_to_vmem [thread:$0]  %s2, 2048, %s22, [#allocation3], 128, 128, 8
    $region13: #{_forward_with_loss.1} parent=1 // pred_fallthru
      _
    // Predicated region
    $region14: #{_forward_with_loss.1} parent=1 // pred_check
      _
    $region15: #{_forward_with_loss.1} parent=1 // pred_check_branch
      %29 = sbr.rel (0) target = $region17
    $region16: #{_forward_with_loss.1} parent=1 // pred_region
      %30 = dma.done [#allocation3], 2048
    $region17: #{_forward_with_loss.1} parent=1 // pred_fallthru
      _
    %v31 = vld [vmem:[#allocation2] sm:$0xff]
    %v32 = vld [vmem:[#allocation2 + $0x8] sm:$0xff]
    %v33 = vld [vmem:[#allocation2 + $0x10] sm:$0xff]
    %v34 = vld [vmem:[#allocation2 + $0x18] sm:$0xff]
    %v35 = vld [vmem:[#allocation2 + $0x20] sm:$0xff]
    %v36 = vld [vmem:[#allocation2 + $0x28] sm:$0xff]
    %v37 = vld [vmem:[#allocation2 + $0x30] sm:$0xff]
    %v38 = vld [vmem:[#allocation2 + $0x38] sm:$0xff]
    %v39 = vld [vmem:[#allocation2 + $0x40] sm:$0xff]
    %v40 = vld [vmem:[#allocation2 + $0x48] sm:$0xff]
    %v41 = vld [vmem:[#allocation2 + $0x50] sm:$0xff]
    %v42 = vld [vmem:[#allocation2 + $0x58] sm:$0xff]
    %v43 = vld [vmem:[#allocation2 + $0x60] sm:$0xff]
    %v44 = vld [vmem:[#allocation2 + $0x68] sm:$0xff]
    %v45 = vld [vmem:[#allocation2 + $0x70] sm:$0xff]
    %v46 = vld [vmem:[#allocation2 + $0x78] sm:$0xff]
    %v47 = vld [vmem:[%s0] sm:$0xff]
    %v48 = vld [vmem:[%s0 + $0x8] sm:$0xff]
    %v49 = vld [vmem:[%s1] sm:$0xff]
    %v50 = vld [vmem:[%s1 + $0x8] sm:$0xff]
    %v51 = vlaneseq
    %v52 = vand.u32 %v51, 127
    %53 = vset.pattern.permute.xlu0 0
    %54 = vperm.xlu0 %53, %v47
    %v55 = vpop.permute.xlu0 %54
    %56 = vset.pattern.permute.xlu0 0
    %57 = vperm.xlu0 %56, %v48
    %v58 = vpop.permute.xlu0 %57
    %vm59 = vcmp.eq.s32.totalorder %v52, %v55
    %vm60 = vcmp.eq.s32.totalorder %v52, %v58
    %v61 = vsel %vm59, 1, 0
    %v62 = vsel %vm60, 1, 0
    %v63 = vcvt.s32.f32 %v61
    %v64 = vcvt.s32.f32 %v62
    %65 = vmatprep.subr.mxu0 0.0
    %v66 = vand.u32 %v46, 4294901760
    %67 = vmatpush1.msra.mxu0 %v66
    %68 = vmatprep.subr.mxu0 0.0
    %v69 = vand.u32 %v45, 4294901760
    %70 = vmatpush1.msra.mxu0 %v69
    %71 = vmatprep.subr.mxu0 0.0
    %v72 = vand.u32 %v44, 4294901760
    %73 = vmatpush1.msra.mxu0 %v72
    %74 = vmatprep.subr.mxu0 0.0
    %v75 = vand.u32 %v43, 4294901760
    %76 = vmatpush1.msra.mxu0 %v75
    %77 = vmatprep.subr.mxu0 0.0
    %v78 = vand.u32 %v42, 4294901760
    %79 = vmatpush1.msra.mxu0 %v78
    %80 = vmatprep.subr.mxu0 0.0
    %v81 = vand.u32 %v41, 4294901760
    %82 = vmatpush1.msra.mxu0 %v81
    %83 = vmatprep.subr.mxu0 0.0
    %v84 = vand.u32 %v40, 4294901760
    %85 = vmatpush1.msra.mxu0 %v84
    %86 = vmatprep.subr.mxu0 0.0
    %v87 = vand.u32 %v39, 4294901760
    %88 = vmatpush1.msra.mxu0 %v87
    %89 = vmatprep.subr.mxu0 0.0
    %v90 = vand.u32 %v38, 4294901760
    %91 = vmatpush1.msra.mxu0 %v90
    %92 = vmatprep.subr.mxu0 0.0
    %v93 = vand.u32 %v37, 4294901760
    %94 = vmatpush1.msra.mxu0 %v93
    %95 = vmatprep.subr.mxu0 0.0
    %v96 = vand.u32 %v36, 4294901760
    %97 = vmatpush1.msra.mxu0 %v96
    %98 = vmatprep.subr.mxu0 0.0
    %v99 = vand.u32 %v35, 4294901760
    %100 = vmatpush1.msra.mxu0 %v99
    %101 = vmatprep.subr.mxu0 0.0
    %v102 = vand.u32 %v34, 4294901760
    %103 = vmatpush1.msra.mxu0 %v102
    %104 = vmatprep.subr.mxu0 0.0
    %v105 = vand.u32 %v33, 4294901760
    %106 = vmatpush1.msra.mxu0 %v105
    %107 = vmatprep.subr.mxu0 0.0
    %v108 = vand.u32 %v32, 4294901760
    %109 = vmatpush1.msra.mxu0 %v108
    %110 = vmatprep.subr.mxu0 0.0
    %v111 = vand.u32 %v31, 4294901760
    %112 = vmatpush1.msra.mxu0 %v111
    %113 = vmatprep.subr.mxu0 0.0
    %114 = vmatpush2.msra.mxu0 0.0
    %115 = vmatprep.subr.mxu0 0.0
    %116 = vmatpush2.msra.mxu0 0.0
    %117 = vmatprep.subr.mxu0 0.0
    %118 = vmatpush2.msra.mxu0 0.0
    %119 = vmatprep.subr.mxu0 0.0
    %120 = vmatpush2.msra.mxu0 0.0
    %121 = vmatprep.subr.mxu0 0.0
    %122 = vmatpush2.msra.mxu0 0.0
    %123 = vmatprep.subr.mxu0 0.0
    %124 = vmatpush2.msra.mxu0 0.0
    %125 = vmatprep.subr.mxu0 0.0
    %126 = vmatpush2.msra.mxu0 0.0
    %127 = vmatprep.subr.mxu0 0.0
    %128 = vmatpush2.msra.mxu0 0.0
    %129 = vmatprep.subr.mxu0 0.0
    %130 = vmatpush2.msra.mxu0 0.0
    %131 = vmatprep.subr.mxu0 0.0
    %132 = vmatpush2.msra.mxu0 0.0
    %133 = vmatprep.subr.mxu0 0.0
    %134 = vmatpush2.msra.mxu0 0.0
    %135 = vmatprep.subr.mxu0 0.0
    %136 = vmatpush2.msra.mxu0 0.0
    %137 = vmatprep.subr.mxu0 0.0
    %138 = vmatpush2.msra.mxu0 0.0
    %139 = vmatprep.subr.mxu0 0.0
    %140 = vmatpush2.msra.mxu0 0.0
    %141 = vmatprep.subr.mxu0 0.0
    %142 = vmatpush2.msra.mxu0 0.0
    %143 = vmatprep.subr.mxu0 0.0
    %144 = vmatpush2.msra.mxu0 0.0
    %145 = vmatprep.mubr.f32.mxu0 0.0
    %v146 = vand.u32 %v63, 4294901760
    %v147 = vsub.f32 %v63, %v146
    %v148 = vand.u32 %v147, 4294901760
    %v149 = vsub.f32 %v147, %v148
    %v150 = vand.u32 %v149, 4294901760
    %151 = vmatmul.mubr.f32.gmra.mxu0 %v150
    %v152 = vpop.f32.mrf.mxu0
    %v153 = vadd.f32 0.0, %v152
    %v154 = vpop.f32.mrf.mxu0
    %155 = vmatprep.mubr.f32.mxu0 0.0
    %v156 = vand.u32 %v64, 4294901760
    %v157 = vsub.f32 %v64, %v156
    %v158 = vand.u32 %v157, 4294901760
    %v159 = vsub.f32 %v157, %v158
    %v160 = vand.u32 %v159, 4294901760
    %161 = vmatmul.mubr.f32.gmra.mxu0 %v160
    %v162 = vpop.f32.mrf.mxu0
    %v163 = vadd.f32 0.0, %v162
    %v164 = vpop.f32.mrf.mxu0
    %165 = vdwg.mxu0
    %166 = vmatprep.subr.mxu0 0.0
    %v167 = vand.u32 %v46, 4294901760
    %v168 = vsub.f32 %v46, %v167
    %v169 = vand.u32 %v168, 4294901760
    %v170 = vsub.f32 %v168, %v169
    %v171 = vand.u32 %v170, 4294901760
    %172 = vmatpush1.msra.mxu0 %v171
    %173 = vmatprep.subr.mxu0 0.0
    %v174 = vand.u32 %v45, 4294901760
    %v175 = vsub.f32 %v45, %v174
    %v176 = vand.u32 %v175, 4294901760
    %v177 = vsub.f32 %v175, %v176
    %v178 = vand.u32 %v177, 4294901760
    %179 = vmatpush1.msra.mxu0 %v178
    %180 = vmatprep.subr.mxu0 0.0
    %v181 = vand.u32 %v44, 4294901760
    %v182 = vsub.f32 %v44, %v181
    %v183 = vand.u32 %v182, 4294901760
    %v184 = vsub.f32 %v182, %v183
    %v185 = vand.u32 %v184, 4294901760
    %186 = vmatpush1.msra.mxu0 %v185
    %187 = vmatprep.subr.mxu0 0.0
    %v188 = vand.u32 %v43, 4294901760
    %v189 = vsub.f32 %v43, %v188
    %v190 = vand.u32 %v189, 4294901760
    %v191 = vsub.f32 %v189, %v190
    %v192 = vand.u32 %v191, 4294901760
    %193 = vmatpush1.msra.mxu0 %v192
    %194 = vmatprep.subr.mxu0 0.0
    %v195 = vand.u32 %v42, 4294901760
    %v196 = vsub.f32 %v42, %v195
    %v197 = vand.u32 %v196, 4294901760
    %v198 = vsub.f32 %v196, %v197
    %v199 = vand.u32 %v198, 4294901760
    %200 = vmatpush1.msra.mxu0 %v199
    %201 = vmatprep.subr.mxu0 0.0
    %v202 = vand.u32 %v41, 4294901760
    %v203 = vsub.f32 %v41, %v202
    %v204 = vand.u32 %v203, 4294901760
    %v205 = vsub.f32 %v203, %v204
    %v206 = vand.u32 %v205, 4294901760
    %207 = vmatpush1.msra.mxu0 %v206
    %208 = vmatprep.subr.mxu0 0.0
    %v209 = vand.u32 %v40, 4294901760
    %v210 = vsub.f32 %v40, %v209
    %v211 = vand.u32 %v210, 4294901760
    %v212 = vsub.f32 %v210, %v211
    %v213 = vand.u32 %v212, 4294901760
    %214 = vmatpush1.msra.mxu0 %v213
    %215 = vmatprep.subr.mxu0 0.0
    %v216 = vand.u32 %v39, 4294901760
    %v217 = vsub.f32 %v39, %v216
    %v218 = vand.u32 %v217, 4294901760
    %v219 = vsub.f32 %v217, %v218
    %v220 = vand.u32 %v219, 4294901760
    %221 = vmatpush1.msra.mxu0 %v220
    %222 = vmatprep.subr.mxu0 0.0
    %v223 = vand.u32 %v38, 4294901760
    %v224 = vsub.f32 %v38, %v223
    %v225 = vand.u32 %v224, 4294901760
    %v226 = vsub.f32 %v224, %v225
    %v227 = vand.u32 %v226, 4294901760
    %228 = vmatpush1.msra.mxu0 %v227
    %229 = vmatprep.subr.mxu0 0.0
    %v230 = vand.u32 %v37, 4294901760
    %v231 = vsub.f32 %v37, %v230
    %v232 = vand.u32 %v231, 4294901760
    %v233 = vsub.f32 %v231, %v232
    %v234 = vand.u32 %v233, 4294901760
    %235 = vmatpush1.msra.mxu0 %v234
    %236 = vmatprep.subr.mxu0 0.0
    %v237 = vand.u32 %v36, 4294901760
    %v238 = vsub.f32 %v36, %v237
    %v239 = vand.u32 %v238, 4294901760
    %v240 = vsub.f32 %v238, %v239
    %v241 = vand.u32 %v240, 4294901760
    %242 = vmatpush1.msra.mxu0 %v241
    %243 = vmatprep.subr.mxu0 0.0
    %v244 = vand.u32 %v35, 4294901760
    %v245 = vsub.f32 %v35, %v244
    %v246 = vand.u32 %v245, 4294901760
    %v247 = vsub.f32 %v245, %v246
    %v248 = vand.u32 %v247, 4294901760
    %249 = vmatpush1.msra.mxu0 %v248
    %250 = vmatprep.subr.mxu0 0.0
    %v251 = vand.u32 %v34, 4294901760
    %v252 = vsub.f32 %v34, %v251
    %v253 = vand.u32 %v252, 4294901760
    %v254 = vsub.f32 %v252, %v253
    %v255 = vand.u32 %v254, 4294901760
    %256 = vmatpush1.msra.mxu0 %v255
    %257 = vmatprep.subr.mxu0 0.0
    %v258 = vand.u32 %v33, 4294901760
    %v259 = vsub.f32 %v33, %v258
    %v260 = vand.u32 %v259, 4294901760
    %v261 = vsub.f32 %v259, %v260
    %v262 = vand.u32 %v261, 4294901760
    %263 = vmatpush1.msra.mxu0 %v262
    %264 = vmatprep.subr.mxu0 0.0
    %v265 = vand.u32 %v32, 4294901760
    %v266 = vsub.f32 %v32, %v265
    %v267 = vand.u32 %v266, 4294901760
    %v268 = vsub.f32 %v266, %v267
    %v269 = vand.u32 %v268, 4294901760
    %270 = vmatpush1.msra.mxu0 %v269
    %271 = vmatprep.subr.mxu0 0.0
    %v272 = vand.u32 %v31, 4294901760
    %v273 = vsub.f32 %v31, %v272
    %v274 = vand.u32 %v273, 4294901760
    %v275 = vsub.f32 %v273, %v274
    %v276 = vand.u32 %v275, 4294901760
    %277 = vmatpush1.msra.mxu0 %v276
    %278 = vmatprep.subr.mxu0 0.0
    %279 = vmatpush2.msra.mxu0 0.0
    %280 = vmatprep.subr.mxu0 0.0
    %281 = vmatpush2.msra.mxu0 0.0
    %282 = vmatprep.subr.mxu0 0.0
    %283 = vmatpush2.msra.mxu0 0.0
    %284 = vmatprep.subr.mxu0 0.0
    %285 = vmatpush2.msra.mxu0 0.0
    %286 = vmatprep.subr.mxu0 0.0
    %287 = vmatpush2.msra.mxu0 0.0
    %288 = vmatprep.subr.mxu0 0.0
    %289 = vmatpush2.msra.mxu0 0.0
    %290 = vmatprep.subr.mxu0 0.0
    %291 = vmatpush2.msra.mxu0 0.0
    %292 = vmatprep.subr.mxu0 0.0
    %293 = vmatpush2.msra.mxu0 0.0
    %294 = vmatprep.subr.mxu0 0.0
    %295 = vmatpush2.msra.mxu0 0.0
    %296 = vmatprep.subr.mxu0 0.0
    %297 = vmatpush2.msra.mxu0 0.0
    %298 = vmatprep.subr.mxu0 0.0
    %299 = vmatpush2.msra.mxu0 0.0
    %300 = vmatprep.subr.mxu0 0.0
    %301 = vmatpush2.msra.mxu0 0.0
    %302 = vmatprep.subr.mxu0 0.0
    %303 = vmatpush2.msra.mxu0 0.0
    %304 = vmatprep.subr.mxu0 0.0
    %305 = vmatpush2.msra.mxu0 0.0
    %306 = vmatprep.subr.mxu0 0.0
    %307 = vmatpush2.msra.mxu0 0.0
    %308 = vmatprep.subr.mxu0 0.0
    %309 = vmatpush2.msra.mxu0 0.0
    %310 = vmatprep.mubr.f32.mxu0 0.0
    %v311 = vand.u32 %v63, 4294901760
    %312 = vmatmul.mubr.f32.gmra.mxu0 %v311
    %v313 = vpop.f32.mrf.mxu0
    %v314 = vadd.f32 %v153, %v313
    %v315 = vpop.f32.mrf.mxu0
    %316 = vmatprep.mubr.f32.mxu0 0.0
    %v317 = vand.u32 %v64, 4294901760
    %318 = vmatmul.mubr.f32.gmra.mxu0 %v317
    %v319 = vpop.f32.mrf.mxu0
    %v320 = vadd.f32 %v163, %v319
    %v321 = vpop.f32.mrf.mxu0
    %322 = vdwg.mxu0
    %323 = vmatprep.subr.mxu0 0.0
    %v324 = vand.u32 %v46, 4294901760
    %v325 = vsub.f32 %v46, %v324
    %326 = vmatpush1.msra.mxu0 %v325
    %327 = vmatprep.subr.mxu0 0.0
    %v328 = vand.u32 %v45, 4294901760
    %v329 = vsub.f32 %v45, %v328
    %330 = vmatpush1.msra.mxu0 %v329
    %331 = vmatprep.subr.mxu0 0.0
    %v332 = vand.u32 %v44, 4294901760
    %v333 = vsub.f32 %v44, %v332
    %334 = vmatpush1.msra.mxu0 %v333
    %335 = vmatprep.subr.mxu0 0.0
    %v336 = vand.u32 %v43, 4294901760
    %v337 = vsub.f32 %v43, %v336
    %338 = vmatpush1.msra.mxu0 %v337
    %339 = vmatprep.subr.mxu0 0.0
    %v340 = vand.u32 %v42, 4294901760
    %v341 = vsub.f32 %v42, %v340
    %342 = vmatpush1.msra.mxu0 %v341
    %343 = vmatprep.subr.mxu0 0.0
    %v344 = vand.u32 %v41, 4294901760
    %v345 = vsub.f32 %v41, %v344
    %346 = vmatpush1.msra.mxu0 %v345
    %347 = vmatprep.subr.mxu0 0.0
    %v348 = vand.u32 %v40, 4294901760
    %v349 = vsub.f32 %v40, %v348
    %350 = vmatpush1.msra.mxu0 %v349
    %351 = vmatprep.subr.mxu0 0.0
    %v352 = vand.u32 %v39, 4294901760
    %v353 = vsub.f32 %v39, %v352
    %354 = vmatpush1.msra.mxu0 %v353
    %355 = vmatprep.subr.mxu0 0.0
    %v356 = vand.u32 %v38, 4294901760
    %v357 = vsub.f32 %v38, %v356
    %358 = vmatpush1.msra.mxu0 %v357
    %359 = vmatprep.subr.mxu0 0.0
    %v360 = vand.u32 %v37, 4294901760
    %v361 = vsub.f32 %v37, %v360
    %362 = vmatpush1.msra.mxu0 %v361
    %363 = vmatprep.subr.mxu0 0.0
    %v364 = vand.u32 %v36, 4294901760
    %v365 = vsub.f32 %v36, %v364
    %366 = vmatpush1.msra.mxu0 %v365
    %367 = vmatprep.subr.mxu0 0.0
    %v368 = vand.u32 %v35, 4294901760
    %v369 = vsub.f32 %v35, %v368
    %370 = vmatpush1.msra.mxu0 %v369
    %371 = vmatprep.subr.mxu0 0.0
    %v372 = vand.u32 %v34, 4294901760
    %v373 = vsub.f32 %v34, %v372
    %374 = vmatpush1.msra.mxu0 %v373
    %375 = vmatprep.subr.mxu0 0.0
    %v376 = vand.u32 %v33, 4294901760
    %v377 = vsub.f32 %v33, %v376
    %378 = vmatpush1.msra.mxu0 %v377
    %379 = vmatprep.subr.mxu0 0.0
    %v380 = vand.u32 %v32, 4294901760
    %v381 = vsub.f32 %v32, %v380
    %382 = vmatpush1.msra.mxu0 %v381
    %383 = vmatprep.subr.mxu0 0.0
    %v384 = vand.u32 %v31, 4294901760
    %v385 = vsub.f32 %v31, %v384
    %386 = vmatpush1.msra.mxu0 %v385
    %387 = vmatprep.subr.mxu0 0.0
    %388 = vmatpush2.msra.mxu0 0.0
    %389 = vmatprep.subr.mxu0 0.0
    %390 = vmatpush2.msra.mxu0 0.0
    %391 = vmatprep.subr.mxu0 0.0
    %392 = vmatpush2.msra.mxu0 0.0
    %393 = vmatprep.subr.mxu0 0.0
    %394 = vmatpush2.msra.mxu0 0.0
    %395 = vmatprep.subr.mxu0 0.0
    %396 = vmatpush2.msra.mxu0 0.0
    %397 = vmatprep.subr.mxu0 0.0
    %398 = vmatpush2.msra.mxu0 0.0
    %399 = vmatprep.subr.mxu0 0.0
    %400 = vmatpush2.msra.mxu0 0.0
    %401 = vmatprep.subr.mxu0 0.0
    %402 = vmatpush2.msra.mxu0 0.0
    %403 = vmatprep.subr.mxu0 0.0
    %404 = vmatpush2.msra.mxu0 0.0
    %405 = vmatprep.subr.mxu0 0.0
    %406 = vmatpush2.msra.mxu0 0.0
    %407 = vmatprep.subr.mxu0 0.0
    %408 = vmatpush2.msra.mxu0 0.0
    %409 = vmatprep.subr.mxu0 0.0
    %410 = vmatpush2.msra.mxu0 0.0
    %411 = vmatprep.subr.mxu0 0.0
    %412 = vmatpush2.msra.mxu0 0.0
    %413 = vmatprep.subr.mxu0 0.0
    %414 = vmatpush2.msra.mxu0 0.0
    %415 = vmatprep.subr.mxu0 0.0
    %416 = vmatpush2.msra.mxu0 0.0
    %417 = vmatprep.subr.mxu0 0.0
    %418 = vmatpush2.msra.mxu0 0.0
    %419 = vmatprep.mubr.f32.mxu0 0.0
    %v420 = vand.u32 %v63, 4294901760
    %v421 = vsub.f32 %v63, %v420
    %422 = vmatmul.mubr.f32.gmra.mxu0 %v421
    %v423 = vpop.f32.mrf.mxu0
    %v424 = vadd.f32 %v314, %v423
    %v425 = vpop.f32.mrf.mxu0
    %426 = vmatprep.mubr.f32.mxu0 0.0
    %v427 = vand.u32 %v64, 4294901760
    %v428 = vsub.f32 %v64, %v427
    %429 = vmatmul.mubr.f32.gmra.mxu0 %v428
    %v430 = vpop.f32.mrf.mxu0
    %v431 = vadd.f32 %v320, %v430
    %v432 = vpop.f32.mrf.mxu0
    %433 = vdwg.mxu0
    %434 = vmatprep.subr.mxu0 0.0
    %v435 = vand.u32 %v46, 4294901760
    %436 = vmatpush1.msra.mxu0 %v435
    %437 = vmatprep.subr.mxu0 0.0
    %v438 = vand.u32 %v45, 4294901760
    %439 = vmatpush1.msra.mxu0 %v438
    %440 = vmatprep.subr.mxu0 0.0
    %v441 = vand.u32 %v44, 4294901760
    %442 = vmatpush1.msra.mxu0 %v441
    %443 = vmatprep.subr.mxu0 0.0
    %v444 = vand.u32 %v43, 4294901760
    %445 = vmatpush1.msra.mxu0 %v444
    %446 = vmatprep.subr.mxu0 0.0
    %v447 = vand.u32 %v42, 4294901760
    %448 = vmatpush1.msra.mxu0 %v447
    %449 = vmatprep.subr.mxu0 0.0
    %v450 = vand.u32 %v41, 4294901760
    %451 = vmatpush1.msra.mxu0 %v450
    %452 = vmatprep.subr.mxu0 0.0
    %v453 = vand.u32 %v40, 4294901760
    %454 = vmatpush1.msra.mxu0 %v453
    %455 = vmatprep.subr.mxu0 0.0
    %v456 = vand.u32 %v39, 4294901760
    %457 = vmatpush1.msra.mxu0 %v456
    %458 = vmatprep.subr.mxu0 0.0
    %v459 = vand.u32 %v38, 4294901760
    %460 = vmatpush1.msra.mxu0 %v459
    %461 = vmatprep.subr.mxu0 0.0
    %v462 = vand.u32 %v37, 4294901760
    %463 = vmatpush1.msra.mxu0 %v462
    %464 = vmatprep.subr.mxu0 0.0
    %v465 = vand.u32 %v36, 4294901760
    %466 = vmatpush1.msra.mxu0 %v465
    %467 = vmatprep.subr.mxu0 0.0
    %v468 = vand.u32 %v35, 4294901760
    %469 = vmatpush1.msra.mxu0 %v468
    %470 = vmatprep.subr.mxu0 0.0
    %v471 = vand.u32 %v34, 4294901760
    %472 = vmatpush1.msra.mxu0 %v471
    %473 = vmatprep.subr.mxu0 0.0
    %v474 = vand.u32 %v33, 4294901760
    %475 = vmatpush1.msra.mxu0 %v474
    %476 = vmatprep.subr.mxu0 0.0
    %v477 = vand.u32 %v32, 4294901760
    %478 = vmatpush1.msra.mxu0 %v477
    %479 = vmatprep.subr.mxu0 0.0
    %v480 = vand.u32 %v31, 4294901760
    %481 = vmatpush1.msra.mxu0 %v480
    %482 = vmatprep.subr.mxu0 0.0
    %483 = vmatpush2.msra.mxu0 0.0
    %484 = vmatprep.subr.mxu0 0.0
    %485 = vmatpush2.msra.mxu0 0.0
    %486 = vmatprep.subr.mxu0 0.0
    %487 = vmatpush2.msra.mxu0 0.0
    %488 = vmatprep.subr.mxu0 0.0
    %489 = vmatpush2.msra.mxu0 0.0
    %490 = vmatprep.subr.mxu0 0.0
    %491 = vmatpush2.msra.mxu0 0.0
    %492 = vmatprep.subr.mxu0 0.0
    %493 = vmatpush2.msra.mxu0 0.0
    %494 = vmatprep.subr.mxu0 0.0
    %495 = vmatpush2.msra.mxu0 0.0
    %496 = vmatprep.subr.mxu0 0.0
    %497 = vmatpush2.msra.mxu0 0.0
    %498 = vmatprep.subr.mxu0 0.0
    %499 = vmatpush2.msra.mxu0 0.0
    %500 = vmatprep.subr.mxu0 0.0
    %501 = vmatpush2.msra.mxu0 0.0
    %502 = vmatprep.subr.mxu0 0.0
    %503 = vmatpush2.msra.mxu0 0.0
    %504 = vmatprep.subr.mxu0 0.0
    %505 = vmatpush2.msra.mxu0 0.0
    %506 = vmatprep.subr.mxu0 0.0
    %507 = vmatpush2.msra.mxu0 0.0
    %508 = vmatprep.subr.mxu0 0.0
    %509 = vmatpush2.msra.mxu0 0.0
    %510 = vmatprep.subr.mxu0 0.0
    %511 = vmatpush2.msra.mxu0 0.0
    %512 = vmatprep.subr.mxu0 0.0
    %513 = vmatpush2.msra.mxu0 0.0
    %514 = vmatprep.mubr.f32.mxu0 0.0
    %v515 = vand.u32 %v63, 4294901760
    %v516 = vsub.f32 %v63, %v515
    %v517 = vand.u32 %v516, 4294901760
    %518 = vmatmul.mubr.f32.gmra.mxu0 %v517
    %v519 = vpop.f32.mrf.mxu0
    %v520 = vadd.f32 %v424, %v519
    %v521 = vpop.f32.mrf.mxu0
    %522 = vmatprep.mubr.f32.mxu0 0.0
    %v523 = vand.u32 %v64, 4294901760
    %v524 = vsub.f32 %v64, %v523
    %v525 = vand.u32 %v524, 4294901760
    %526 = vmatmul.mubr.f32.gmra.mxu0 %v525
    %v527 = vpop.f32.mrf.mxu0
    %v528 = vadd.f32 %v431, %v527
    %v529 = vpop.f32.mrf.mxu0
    %530 = vdwg.mxu0
    %531 = vmatprep.subr.mxu0 0.0
    %v532 = vand.u32 %v46, 4294901760
    %v533 = vsub.f32 %v46, %v532
    %v534 = vand.u32 %v533, 4294901760
    %535 = vmatpush1.msra.mxu0 %v534
    %536 = vmatprep.subr.mxu0 0.0
    %v537 = vand.u32 %v45, 4294901760
    %v538 = vsub.f32 %v45, %v537
    %v539 = vand.u32 %v538, 4294901760
    %540 = vmatpush1.msra.mxu0 %v539
    %541 = vmatprep.subr.mxu0 0.0
    %v542 = vand.u32 %v44, 4294901760
    %v543 = vsub.f32 %v44, %v542
    %v544 = vand.u32 %v543, 4294901760
    %545 = vmatpush1.msra.mxu0 %v544
    %546 = vmatprep.subr.mxu0 0.0
    %v547 = vand.u32 %v43, 4294901760
    %v548 = vsub.f32 %v43, %v547
    %v549 = vand.u32 %v548, 4294901760
    %550 = vmatpush1.msra.mxu0 %v549
    %551 = vmatprep.subr.mxu0 0.0
    %v552 = vand.u32 %v42, 4294901760
    %v553 = vsub.f32 %v42, %v552
    %v554 = vand.u32 %v553, 4294901760
    %555 = vmatpush1.msra.mxu0 %v554
    %556 = vmatprep.subr.mxu0 0.0
    %v557 = vand.u32 %v41, 4294901760
    %v558 = vsub.f32 %v41, %v557
    %v559 = vand.u32 %v558, 4294901760
    %560 = vmatpush1.msra.mxu0 %v559
    %561 = vmatprep.subr.mxu0 0.0
    %v562 = vand.u32 %v40, 4294901760
    %v563 = vsub.f32 %v40, %v562
    %v564 = vand.u32 %v563, 4294901760
    %565 = vmatpush1.msra.mxu0 %v564
    %566 = vmatprep.subr.mxu0 0.0
    %v567 = vand.u32 %v39, 4294901760
    %v568 = vsub.f32 %v39, %v567
    %v569 = vand.u32 %v568, 4294901760
    %570 = vmatpush1.msra.mxu0 %v569
    %571 = vmatprep.subr.mxu0 0.0
    %v572 = vand.u32 %v38, 4294901760
    %v573 = vsub.f32 %v38, %v572
    %v574 = vand.u32 %v573, 4294901760
    %575 = vmatpush1.msra.mxu0 %v574
    %576 = vmatprep.subr.mxu0 0.0
    %v577 = vand.u32 %v37, 4294901760
    %v578 = vsub.f32 %v37, %v577
    %v579 = vand.u32 %v578, 4294901760
    %580 = vmatpush1.msra.mxu0 %v579
    %581 = vmatprep.subr.mxu0 0.0
    %v582 = vand.u32 %v36, 4294901760
    %v583 = vsub.f32 %v36, %v582
    %v584 = vand.u32 %v583, 4294901760
    %585 = vmatpush1.msra.mxu0 %v584
    %586 = vmatprep.subr.mxu0 0.0
    %v587 = vand.u32 %v35, 4294901760
    %v588 = vsub.f32 %v35, %v587
    %v589 = vand.u32 %v588, 4294901760
    %590 = vmatpush1.msra.mxu0 %v589
    %591 = vmatprep.subr.mxu0 0.0
    %v592 = vand.u32 %v34, 4294901760
    %v593 = vsub.f32 %v34, %v592
    %v594 = vand.u32 %v593, 4294901760
    %595 = vmatpush1.msra.mxu0 %v594
    %596 = vmatprep.subr.mxu0 0.0
    %v597 = vand.u32 %v33, 4294901760
    %v598 = vsub.f32 %v33, %v597
    %v599 = vand.u32 %v598, 4294901760
    %600 = vmatpush1.msra.mxu0 %v599
    %601 = vmatprep.subr.mxu0 0.0
    %v602 = vand.u32 %v32, 4294901760
    %v603 = vsub.f32 %v32, %v602
    %v604 = vand.u32 %v603, 4294901760
    %605 = vmatpush1.msra.mxu0 %v604
    %606 = vmatprep.subr.mxu0 0.0
    %v607 = vand.u32 %v31, 4294901760
    %v608 = vsub.f32 %v31, %v607
    %v609 = vand.u32 %v608, 4294901760
    %610 = vmatpush1.msra.mxu0 %v609
    %611 = vmatprep.subr.mxu0 0.0
    %612 = vmatpush2.msra.mxu0 0.0
    %613 = vmatprep.subr.mxu0 0.0
    %614 = vmatpush2.msra.mxu0 0.0
    %615 = vmatprep.subr.mxu0 0.0
    %616 = vmatpush2.msra.mxu0 0.0
    %617 = vmatprep.subr.mxu0 0.0
    %618 = vmatpush2.msra.mxu0 0.0
    %619 = vmatprep.subr.mxu0 0.0
    %620 = vmatpush2.msra.mxu0 0.0
    %621 = vmatprep.subr.mxu0 0.0
    %622 = vmatpush2.msra.mxu0 0.0
    %623 = vmatprep.subr.mxu0 0.0
    %624 = vmatpush2.msra.mxu0 0.0
    %625 = vmatprep.subr.mxu0 0.0
    %626 = vmatpush2.msra.mxu0 0.0
    %627 = vmatprep.subr.mxu0 0.0
    %628 = vmatpush2.msra.mxu0 0.0
    %629 = vmatprep.subr.mxu0 0.0
    %630 = vmatpush2.msra.mxu0 0.0
    %631 = vmatprep.subr.mxu0 0.0
    %632 = vmatpush2.msra.mxu0 0.0
    %633 = vmatprep.subr.mxu0 0.0
    %634 = vmatpush2.msra.mxu0 0.0
    %635 = vmatprep.subr.mxu0 0.0
    %636 = vmatpush2.msra.mxu0 0.0
    %637 = vmatprep.subr.mxu0 0.0
    %638 = vmatpush2.msra.mxu0 0.0
    %639 = vmatprep.subr.mxu0 0.0
    %640 = vmatpush2.msra.mxu0 0.0
    %641 = vmatprep.subr.mxu0 0.0
    %642 = vmatpush2.msra.mxu0 0.0
    %643 = vmatprep.mubr.f32.mxu0 0.0
    %v644 = vand.u32 %v63, 4294901760
    %645 = vmatmul.mubr.f32.gmra.mxu0 %v644
    %v646 = vpop.f32.mrf.mxu0
    %v647 = vadd.f32 %v520, %v646
    %v648 = vpop.f32.mrf.mxu0
    %649 = vmatprep.mubr.f32.mxu0 0.0
    %v650 = vand.u32 %v64, 4294901760
    %651 = vmatmul.mubr.f32.gmra.mxu0 %v650
    %v652 = vpop.f32.mrf.mxu0
    %v653 = vadd.f32 %v528, %v652
    %v654 = vpop.f32.mrf.mxu0
    %655 = vdwg.mxu0
    %656 = vmatprep.subr.mxu0 0.0
    %v657 = vand.u32 %v46, 4294901760
    %658 = vmatpush1.msra.mxu0 %v657
    %659 = vmatprep.subr.mxu0 0.0
    %v660 = vand.u32 %v45, 4294901760
    %661 = vmatpush1.msra.mxu0 %v660
    %662 = vmatprep.subr.mxu0 0.0
    %v663 = vand.u32 %v44, 4294901760
    %664 = vmatpush1.msra.mxu0 %v663
    %665 = vmatprep.subr.mxu0 0.0
    %v666 = vand.u32 %v43, 4294901760
    %667 = vmatpush1.msra.mxu0 %v666
    %668 = vmatprep.subr.mxu0 0.0
    %v669 = vand.u32 %v42, 4294901760
    %670 = vmatpush1.msra.mxu0 %v669
    %671 = vmatprep.subr.mxu0 0.0
    %v672 = vand.u32 %v41, 4294901760
    %673 = vmatpush1.msra.mxu0 %v672
    %674 = vmatprep.subr.mxu0 0.0
    %v675 = vand.u32 %v40, 4294901760
    %676 = vmatpush1.msra.mxu0 %v675
    %677 = vmatprep.subr.mxu0 0.0
    %v678 = vand.u32 %v39, 4294901760
    %679 = vmatpush1.msra.mxu0 %v678
    %680 = vmatprep.subr.mxu0 0.0
    %v681 = vand.u32 %v38, 4294901760
    %682 = vmatpush1.msra.mxu0 %v681
    %683 = vmatprep.subr.mxu0 0.0
    %v684 = vand.u32 %v37, 4294901760
    %685 = vmatpush1.msra.mxu0 %v684
    %686 = vmatprep.subr.mxu0 0.0
    %v687 = vand.u32 %v36, 4294901760
    %688 = vmatpush1.msra.mxu0 %v687
    %689 = vmatprep.subr.mxu0 0.0
    %v690 = vand.u32 %v35, 4294901760
    %691 = vmatpush1.msra.mxu0 %v690
    %692 = vmatprep.subr.mxu0 0.0
    %v693 = vand.u32 %v34, 4294901760
    %694 = vmatpush1.msra.mxu0 %v693
    %695 = vmatprep.subr.mxu0 0.0
    %v696 = vand.u32 %v33, 4294901760
    %697 = vmatpush1.msra.mxu0 %v696
    %698 = vmatprep.subr.mxu0 0.0
    %v699 = vand.u32 %v32, 4294901760
    %700 = vmatpush1.msra.mxu0 %v699
    %701 = vmatprep.subr.mxu0 0.0
    %v702 = vand.u32 %v31, 4294901760
    %703 = vmatpush1.msra.mxu0 %v702
    %704 = vmatprep.subr.mxu0 0.0
    %705 = vmatpush2.msra.mxu0 0.0
    %706 = vmatprep.subr.mxu0 0.0
    %707 = vmatpush2.msra.mxu0 0.0
    %708 = vmatprep.subr.mxu0 0.0
    %709 = vmatpush2.msra.mxu0 0.0
    %710 = vmatprep.subr.mxu0 0.0
    %711 = vmatpush2.msra.mxu0 0.0
    %712 = vmatprep.subr.mxu0 0.0
    %713 = vmatpush2.msra.mxu0 0.0
    %714 = vmatprep.subr.mxu0 0.0
    %715 = vmatpush2.msra.mxu0 0.0
    %716 = vmatprep.subr.mxu0 0.0
    %717 = vmatpush2.msra.mxu0 0.0
    %718 = vmatprep.subr.mxu0 0.0
    %719 = vmatpush2.msra.mxu0 0.0
    %720 = vmatprep.subr.mxu0 0.0
    %721 = vmatpush2.msra.mxu0 0.0
    %722 = vmatprep.subr.mxu0 0.0
    %723 = vmatpush2.msra.mxu0 0.0
    %724 = vmatprep.subr.mxu0 0.0
    %725 = vmatpush2.msra.mxu0 0.0
    %726 = vmatprep.subr.mxu0 0.0
    %727 = vmatpush2.msra.mxu0 0.0
    %728 = vmatprep.subr.mxu0 0.0
    %729 = vmatpush2.msra.mxu0 0.0
    %730 = vmatprep.subr.mxu0 0.0
    %731 = vmatpush2.msra.mxu0 0.0
    %732 = vmatprep.subr.mxu0 0.0
    %733 = vmatpush2.msra.mxu0 0.0
    %734 = vmatprep.subr.mxu0 0.0
    %735 = vmatpush2.msra.mxu0 0.0
    %736 = vmatprep.mubr.f32.mxu0 0.0
    %v737 = vand.u32 %v63, 4294901760
    %738 = vmatmul.mubr.f32.gmra.mxu0 %v737
    %v739 = vpop.f32.mrf.mxu0
    %v740 = vadd.f32 %v647, %v739
    %v741 = vpop.f32.mrf.mxu0
    %742 = vmatprep.mubr.f32.mxu0 0.0
    %v743 = vand.u32 %v64, 4294901760
    %744 = vmatmul.mubr.f32.gmra.mxu0 %v743
    %v745 = vpop.f32.mrf.mxu0
    %v746 = vadd.f32 %v653, %v745
    %v747 = vpop.f32.mrf.mxu0
    %748 = vdwg.mxu0
    %749 = vst [vmem:[#allocation5] sm:$0xff] %v740
    %750 = vst [vmem:[#allocation5 + $0x8] sm:$0xff] %v746
    %751 = vmax.xlane.f32.xlu0 %v740
    %v752 = vpop.xlane.xlu0 %751
    %753 = vmax.xlane.f32.xlu0 %v746
    %v754 = vpop.xlane.xlu0 %753
    %v755 = vsub.f32 %v740, %v752
    %v756 = vsub.f32 %v746, %v754
    %v757 = vmul.f32 %v755, 1.442695
    %v758 = vpow.pop %v757
    %v759 = vmul.f32 %v756, 1.442695
    %v760 = vpow.pop %v759
    %761 = vadd.xlane.f32.xlu0 %v758
    %v762 = vpop.xlane.xlu0 %761
    %763 = vadd.xlane.f32.xlu0 %v760
    %v764 = vpop.xlane.xlu0 %763
    %v765 = vlog2.pop %v762
    %v766 = vmul.f32 %v765, 0.6931472
    %v767 = vlog2.pop %v764
    %v768 = vmul.f32 %v767, 0.6931472
    %v769 = vadd.f32 %v752, %v766
    %v770 = vadd.f32 %v754, %v768
    %771 = vset.pattern.permute.xlu0 0
    %772 = vperm.xlu0 %771, %v49
    %v773 = vpop.permute.xlu0 %772
    %774 = vset.pattern.permute.xlu0 0
    %775 = vperm.xlu0 %774, %v50
    %v776 = vpop.permute.xlu0 %775
    %vm777 = vcmp.eq.s32.totalorder %v52, %v773
    %vm778 = vcmp.eq.s32.totalorder %v52, %v776
    %v779 = vsel %vm777, %v740, 0.0
    %v780 = vsel %vm778, %v746, 0.0
    %781 = vadd.xlane.f32.xlu0 %v779
    %v782 = vpop.xlane.xlu0 %781
    %783 = vadd.xlane.f32.xlu0 %v780
    %v784 = vpop.xlane.xlu0 %783
    %v785 = vlaneseq
    %v786 = vshrl.u32 %v785, 7
    %v787 = vadd.s32 %v786, 8
    %s788 = smul.u32 0, 16
    %v789 = vstv %s788
    %v790 = vadd.s32 %v789, %v786
    %v791 = vadd.s32 %v789, %v787
    %vm792 = vcmp.lt.s32.totalorder %v790, 16
    %vm793 = vcmp.lt.s32.totalorder %v791, 16
    %v794 = vsub.f32 %v769, %v782
    %v795 = vsub.f32 %v770, %v784
    %v796 = vsel %vm792, %v794, 0.0
    %v797 = vsel %vm793, %v795, 0.0
    %vm798 = vcmask 7168
    %799 = vst.msk [vmem:[%s4] sm:$0xff] %vm798, %v796
    %800 = vst.msk [vmem:[%s4 + $0x8] sm:$0xff] %vm798, %v797
    // Predicated region
    $region18: #{_forward_with_loss.1} parent=1 // pred_check
      _
    $region19: #{_forward_with_loss.1} parent=1 // pred_check_branch
      %802 = sbr.rel (0) target = $region21
    $region20: #{_forward_with_loss.1} parent=1 // pred_region
      %s804 = ssub.s32 256, 256
      %805 = vsyncadd [#allocation4], %s804
      %s806 = sshll.u32 [#allocation5], 4
      %s807 = int_to_ptr.vmem [resolvable:$true] %s806
      %812 = dma.vmem_to_hbm [thread:$0]  %s807, 256, %s3, [#allocation4], 128, 128, 8
    $region21: #{_forward_with_loss.1} parent=1 // pred_fallthru
      _
    // Predicated region
    $region22: #{_forward_with_loss.1} parent=1 // pred_check
      _
    $region23: #{_forward_with_loss.1} parent=1 // pred_check_branch
      %814 = sbr.rel (0) target = $region25
    $region24: #{_forward_with_loss.1} parent=1 // pred_region
      _
    $region25: #{_forward_with_loss.1} parent=1 // pred_fallthru
      _
    // Predicated region
    $region26: #{_forward_with_loss.1} parent=1 // pred_check
      _
    $region27: #{_forward_with_loss.1} parent=1 // pred_check_branch
      %816 = sbr.rel (0) target = $region29
    $region28: #{_forward_with_loss.1} parent=1 // pred_region
      %817 = dma.done [#allocation4], 256
    $region29: #{_forward_with_loss.1} parent=1 // pred_fallthru
      _
    // Predicated region
    $region30: #{_forward_with_loss.1} parent=1 // pred_check
      _
    $region31: #{_forward_with_loss.1} parent=1 // pred_check_branch
      %819 = sbr.rel (0) target = $region33
    $region32: #{_forward_with_loss.1} parent=1 // pred_region
      _
    $region33: #{_forward_with_loss.1} parent=1 // pred_fallthru
      _
    %820 = vsyncpa [#allocation3], 1
    %821 = vsyncpa [#allocation4], 1

</llo_original>
